<compile_context>
chip_gen: v5e
topology: v5e:2x2
jax: 0.10.0
libtpu: 0.0.40
codegen_flags: <defaults>
</compile_context>

<pallas_src>
import jax
import jax.numpy as jnp
from jax.experimental import pallas as pl
from jax.experimental.pallas import tpu as pltpu

PATCH = 16                 # patch size of the synthetic backbone
EMB_DIM = 512              # Arcface embedding dimension
INTERP_SIZE = (112, 112)   # model == 'Arcface'


def _interp_patch_mean(img, out_hw, patch):
    """Nearest interp (PyTorch mode='nearest': src = floor(dst*in/out)) followed by the
    mean over 16x16 patch positions, computed as ONE gather + strided reduction over the
    interpolated image (no chained-gather intermediates, no [B,P,F] patchification).
    Emits bf16 so the pad + kernel-input DMA move half the bytes; the reduction itself
    runs in f32.  Features ordered (c, ph, pw) to match the projection weight layout."""
    B, C, H, W = img.shape
    OH, OW = out_hw
    h_idx = (jnp.arange(OH) * H) // OH
    w_idx = (jnp.arange(OW) * W) // OW
    x = img[:, :, h_idx[:, None], w_idx[None, :]]          # [B, C, OH, OW], single gather
    gh, gw = OH // patch, OW // patch
    x = x.reshape(B, C, gh, patch, gw, patch)
    m = jnp.mean(x, axis=(2, 4))                           # [B, C, patch, patch], f32
    return m.reshape(B, C * patch * patch).astype(jnp.bfloat16)   # [B, F] bf16


def _pick_batch_tile(B):
    """Batch tile selection:
      * multiple of 16 rows (bf16 packs 16 rows per sublane-packed vreg),
      * as close to 512 rows as the batch allows (HBM-roofline sweet spot; VMEM at
        TB=512 is <6 MiB double-buffered, fine even for v7x's 64 MiB),
      * >=2 grid steps whenever the batch permits, so dimension_semantics=('parallel',)
        can shard the grid across v7x's two TensorCores."""
    b16 = -(-B // 16) * 16
    if b16 <= 16:
        return 16                                  # tiny batch: one 16-row tile
    if b16 <= 1024:
        half = -(-b16 // 2)                        # split into (at least) 2 grid steps
        return min(512, -(-half // 16) * 16)
    return 512                                     # large batch: 512-row tiles, >=3 steps


def _id_kernel(x_ref, w_ref, b_ref, out_ref):
    # x_ref: (TB, F) bf16   w_ref: (F, D) bf16 (grid-resident)   b_ref: (1, D) f32
    # out_ref: (TB, D) f32
    emb = jnp.dot(x_ref[...], w_ref[...],
                  preferred_element_type=jnp.float32)       # (TB, D), f32 accumulation
    emb = emb + b_ref[...]                                  # bias (broadcast over rows)
    # F.normalize(p=2, dim=1): x / max(||x||, 1e-12) == x * rsqrt(max(||x||^2, 1e-24)).
    # The clamp also keeps padded (bias-only) rows finite — do not remove.
    sq = jnp.sum(emb * emb, axis=1, keepdims=True)          # (TB, 1)
    inv = jax.lax.rsqrt(jnp.maximum(sq, 1e-24))             # EUP rsqrt
    out_ref[...] = (emb * inv).astype(out_ref.dtype)


def id_extractor_forward(img, w, b):
    """img: [B, 3, H, W] float32 (NCHW).
    w:   [768, 512] projection weight — pass bf16 to keep the cast out of the hot path.
    b:   [1, 512] float32 bias.
    Returns L2-normalized [B, EMB_DIM] float32 embeddings."""
    feats = _interp_patch_mean(img, INTERP_SIZE, PATCH)     # [B, F] bf16 (fused prolog)
    B, F = feats.shape
    w_bf = w if w.dtype == jnp.bfloat16 else w.astype(jnp.bfloat16)
    D = w_bf.shape[1]

    TB = _pick_batch_tile(B)
    B_pad = -(-B // TB) * TB
    if B_pad != B:
        feats = jnp.pad(feats, ((0, B_pad - B), (0, 0)))    # pad in bf16 (half the bytes)

    out = pl.pallas_call(
        _id_kernel,
        out_shape=jax.ShapeDtypeStruct((B_pad, D), jnp.float32),
        grid_spec=pltpu.PrefetchScalarGridSpec(
            num_scalar_prefetch=0,
            grid=(B_pad // TB,),
            in_specs=[
                pl.BlockSpec((TB, F), lambda i: (i, 0)),    # this tile's mean features
                pl.BlockSpec((F, D), lambda i: (0, 0)),     # projection weight, resident
                pl.BlockSpec((1, D), lambda i: (0, 0)),     # bias, resident
            ],
            out_specs=pl.BlockSpec((TB, D), lambda i: (i, 0)),  # lane-dense f32 store
        ),
        compiler_params=pltpu.CompilerParams(
            dimension_semantics=("parallel",)),             # megacore-shardable grid
    )(feats, w_bf, b)
    return out[:B]


def _reference_forward_original_path(img, w, b):
    """Pure-JAX f32 reference of the pre-rewrite formulation:
    interp -> patchify -> per-patch matmul -> mean over patches -> bias -> L2 norm."""
    B, C, H, W = img.shape
    OH, OW = INTERP_SIZE
    h_idx = (jnp.arange(OH) * H) // OH
    w_idx = (jnp.arange(OW) * W) // OW
    x = img[:, :, h_idx[:, None], w_idx[None, :]]
    gh, gw = OH // PATCH, OW // PATCH
    x = x.reshape(B, C, gh, PATCH, gw, PATCH)
    x = jnp.transpose(x, (0, 2, 4, 1, 3, 5)).reshape(B, gh * gw, C * PATCH * PATCH)
    emb = jnp.mean(x @ w, axis=1) + b[0]
    norm = jnp.sqrt(jnp.sum(emb * emb, axis=1, keepdims=True))
    return emb / jnp.maximum(norm, 1e-12)


if __name__ == "__main__":
    key = jax.random.PRNGKey(0)
    k_img, k_w, k_b = jax.random.split(key, 3)

    B, C, H, W = 2, 3, 16, 16
    F_in = C * PATCH * PATCH                                 # 768

    img = jax.random.normal(k_img, (B, C, H, W), dtype=jnp.float32)
    # deterministic synthetic backbone parameters
    w = jax.random.normal(k_w, (F_in, EMB_DIM), dtype=jnp.float32) * (1.0 / jnp.sqrt(F_in))
    b = jax.random.normal(k_b, (1, EMB_DIM), dtype=jnp.float32) * 0.01

    # Weight cast hoisted out of the per-call path ("checkpoint load" time).
    w_bf = w.astype(jnp.bfloat16)

    fwd = jax.jit(id_extractor_forward)
    out = jax.block_until_ready(fwd(img, w_bf, b))

    ref = _reference_forward_original_path(img, w, b)        # f32, un-rewritten math
    assert out.shape == (B, EMB_DIM)
    # unit-norm embeddings (normalization done in f32 inside the kernel)
    assert jnp.allclose(jnp.sum(out * out, axis=1), 1.0, atol=1e-4)
    # bf16 matmul operands -> looser tolerance vs. the pure-f32 original-path reference
    assert jnp.allclose(out, ref, atol=1e-2, rtol=1e-2)

    print("KERNEL_OK")
</pallas_src>

<mosaic_0001>
module attributes {stable_mosaic.version = 11 : i64} {
  func.func @_id_kernel(%arg0: i32, %arg1: memref<16x768xbf16, #tpu.memory_space<vmem>>, %arg2: memref<768x512xbf16, #tpu.memory_space<vmem>>, %arg3: memref<1x512xf32, #tpu.memory_space<vmem>>, %arg4: memref<16x512xf32, #tpu.memory_space<vmem>>) attributes {dimension_semantics = [#tpu.dimension_semantics<parallel>], iteration_bounds = array<i64: 1>, scalar_prefetch = 0 : i64, scratch_operands = 0 : i64, tpu.core_type = #tpu.core_type<tc>, window_params = [{transform_indices = @transform_0, window_bounds = array<i64: 16, 768>}, {pipeline_mode = #tpu.pipeline_mode<synchronous>, transform_indices = @transform_1, window_bounds = array<i64: 768, 512>}, {pipeline_mode = #tpu.pipeline_mode<synchronous>, transform_indices = @transform_2, window_bounds = array<i64: 1, 512>}, {transform_indices = @transform_3, window_bounds = array<i64: 16, 512>}]} {
    %c0 = arith.constant 0 : index
    %c0_0 = arith.constant 0 : index
    %0 = vector.load %arg1[%c0, %c0_0] : memref<16x768xbf16, #tpu.memory_space<vmem>>, vector<16x768xbf16>
    %c0_1 = arith.constant 0 : index
    %c0_2 = arith.constant 0 : index
    %1 = vector.load %arg2[%c0_1, %c0_2] : memref<768x512xbf16, #tpu.memory_space<vmem>>, vector<768x512xbf16>
    %cst = arith.constant dense<0.000000e+00> : vector<16x512xf32>
    %2 = tpu.matmul %0, %1, %cst {dimension_numbers = #tpu.dot_dimension_numbers<[1], [0], [0], [1], [0, 0, 1, 1], [], []>} : vector<16x768xbf16>, vector<768x512xbf16>, vector<16x512xf32> -> vector<16x512xf32>
    %c0_3 = arith.constant 0 : index
    %c0_4 = arith.constant 0 : index
    %3 = vector.load %arg3[%c0_3, %c0_4] : memref<1x512xf32, #tpu.memory_space<vmem>>, vector<1x512xf32>
    %4 = vector.broadcast %3 : vector<1x512xf32> to vector<16x512xf32>
    %5 = arith.addf %2, %4 : vector<16x512xf32>
    %6 = arith.mulf %5, %5 : vector<16x512xf32>
    %cst_5 = arith.constant dense<0.000000e+00> : vector<16xf32>
    %7 = vector.multi_reduction <add>, %6, %cst_5 [1] : vector<16x512xf32> to vector<16xf32>
    %8 = vector.shape_cast %7 : vector<16xf32> to vector<16x1xf32>
    %cst_6 = arith.constant 1.000000e-24 : f32
    %9 = vector.broadcast %cst_6 : f32 to vector<16x1xf32>
    %10 = arith.maximumf %8, %9 : vector<16x1xf32>
    %11 = math.rsqrt %10 : vector<16x1xf32>
    %12 = vector.broadcast %11 : vector<16x1xf32> to vector<16x512xf32>
    %13 = arith.mulf %5, %12 : vector<16x512xf32>
    %c0_7 = arith.constant 0 : index
    %c0_8 = arith.constant 0 : index
    %14 = vector.load %arg4[%c0_7, %c0_8] : memref<16x512xf32, #tpu.memory_space<vmem>>, vector<16x512xf32>
    tpu.vector_store %arg4[%c0_7, %c0_8], %13 {strides = array<i32>} : memref<16x512xf32, #tpu.memory_space<vmem>>, vector<16x512xf32>,
    return
  }
  func.func @transform_0(%arg0: i32) -> (i32, i32) {
    %c0_i32 = arith.constant 0 : i32
    %c0_i32_0 = arith.constant 0 : i32
    return %arg0, %c0_i32 : i32, i32
  }
  func.func @transform_1(%arg0: i32) -> (i32, i32) {
    %c0_i32 = arith.constant 0 : i32
    %c0_i32_0 = arith.constant 0 : i32
    %c0_i32_1 = arith.constant 0 : i32
    return %c0_i32, %c0_i32_0 : i32, i32
  }
  func.func @transform_2(%arg0: i32) -> (i32, i32) {
    %c0_i32 = arith.constant 0 : i32
    %c0_i32_0 = arith.constant 0 : i32
    %c0_i32_1 = arith.constant 0 : i32
    return %c0_i32, %c0_i32_0 : i32, i32
  }
  func.func @transform_3(%arg0: i32) -> (i32, i32) {
    %c0_i32 = arith.constant 0 : i32
    %c0_i32_0 = arith.constant 0 : i32
    return %arg0, %c0_i32 : i32, i32
  }
}

</mosaic_0001>

<llo_original>
// kernel: id_extractor_forward.1
$region0: #{id_extractor_forward.1}
  #allocation0 [shape = 'u32[]', space=smem, size = 0x4, offset = 0x4, fixed_abs, tag = 'smem constant byte address 0x4 - core index']
  #allocation1 [shape = 'u32[72,128]{1,0:T(1,128)}', space=vmem, size = 0x9000, scoped, tag = 'internal scratch']
  %s0 = inlined_call_operand.vmem [shape: bf16[16,768], index: 0, kind: input, shape index: {}]
  %s1 = inlined_call_operand.vmem [shape: bf16[768,512], index: 1, kind: input, shape index: {}]
  %s2 = inlined_call_operand.vmem [shape: f32[1,512], index: 2, kind: input, shape index: {}]
  %s3 = inlined_call_operand.vmem [shape: f32[16,512], index: 3, kind: output, shape index: {}]
  %s4 = sld [smem:[#allocation0]]
  $region22: #{id_extractor_forward.1} parent=0
    _
  %s6 = ssub.s32 1, %s4
  %s7 = scalar_select 0, %s6, %s4
  // Predicated region
  $region2: #{id_extractor_forward.1} parent=0 // pred_check
    _
  $region3: #{id_extractor_forward.1} parent=0 // pred_check_branch
    %9 = sbr.rel (0) target = $region5
  $region4: #{id_extractor_forward.1} parent=0 // pred_region
    _
  $region5: #{id_extractor_forward.1} parent=0 // pred_fallthru
    _
  // Predicated region
  $region6: #{id_extractor_forward.1} parent=0 // pred_check
    _
  $region7: #{id_extractor_forward.1} parent=0 // pred_check_branch
    %11 = sbr.rel (0) target = $region9
  $region8: #{id_extractor_forward.1} parent=0 // pred_region
    _
  $region9: #{id_extractor_forward.1} parent=0 // pred_fallthru
    _
  // Predicated region
  $region10: #{id_extractor_forward.1} parent=0 // pred_check
    _
  $region11: #{id_extractor_forward.1} parent=0 // pred_check_branch
    %13 = sbr.rel (0) target = $region13
  $region12: #{id_extractor_forward.1} parent=0 // pred_region
    _
  $region13: #{id_extractor_forward.1} parent=0 // pred_fallthru
    _
  %v14 = vld [vmem:[%s0] sm:$0xff]
  %v15 = vld [vmem:[%s0 + $0x8] sm:$0xff]
  %v16 = vld [vmem:[%s0 + $0x10] sm:$0xff]
  %v17 = vld [vmem:[%s0 + $0x18] sm:$0xff]
  %v18 = vld [vmem:[%s0 + $0x20] sm:$0xff]
  %v19 = vld [vmem:[%s0 + $0x28] sm:$0xff]
  %v20 = vld [vmem:[%s1] sm:$0xff]
  %v21 = vld [vmem:[%s1 + $0x8] sm:$0xff]
  %v22 = vld [vmem:[%s1 + $0x10] sm:$0xff]
  %v23 = vld [vmem:[%s1 + $0x18] sm:$0xff]
  %v24 = vld [vmem:[%s1 + $0x20] sm:$0xff]
  %v25 = vld [vmem:[%s1 + $0x28] sm:$0xff]
  %v26 = vld [vmem:[%s1 + $0x30] sm:$0xff]
  %v27 = vld [vmem:[%s1 + $0x38] sm:$0xff]
  %v28 = vld [vmem:[%s1 + $0x40] sm:$0xff]
  %v29 = vld [vmem:[%s1 + $0x48] sm:$0xff]
  %v30 = vld [vmem:[%s1 + $0x50] sm:$0xff]
  %v31 = vld [vmem:[%s1 + $0x58] sm:$0xff]
  %v32 = vld [vmem:[%s1 + $0x60] sm:$0xff]
  %v33 = vld [vmem:[%s1 + $0x68] sm:$0xff]
  %v34 = vld [vmem:[%s1 + $0x70] sm:$0xff]
  %v35 = vld [vmem:[%s1 + $0x78] sm:$0xff]
  %v36 = vld [vmem:[%s1 + $0x80] sm:$0xff]
  %v37 = vld [vmem:[%s1 + $0x88] sm:$0xff]
  %v38 = vld [vmem:[%s1 + $0x90] sm:$0xff]
  %v39 = vld [vmem:[%s1 + $0x98] sm:$0xff]
  %v40 = vld [vmem:[%s1 + $0xa0] sm:$0xff]
  %v41 = vld [vmem:[%s1 + $0xa8] sm:$0xff]
  %v42 = vld [vmem:[%s1 + $0xb0] sm:$0xff]
  %v43 = vld [vmem:[%s1 + $0xb8] sm:$0xff]
  %v44 = vld [vmem:[%s1 + $0xc0] sm:$0xff]
  %v45 = vld [vmem:[%s1 + $0xc8] sm:$0xff]
  %v46 = vld [vmem:[%s1 + $0xd0] sm:$0xff]
  %v47 = vld [vmem:[%s1 + $0xd8] sm:$0xff]
  %v48 = vld [vmem:[%s1 + $0xe0] sm:$0xff]
  %v49 = vld [vmem:[%s1 + $0xe8] sm:$0xff]
  %v50 = vld [vmem:[%s1 + $0xf0] sm:$0xff]
  %v51 = vld [vmem:[%s1 + $0xf8] sm:$0xff]
  %v52 = vld [vmem:[%s1 + $0x100] sm:$0xff]
  %v53 = vld [vmem:[%s1 + $0x108] sm:$0xff]
  %v54 = vld [vmem:[%s1 + $0x110] sm:$0xff]
  %v55 = vld [vmem:[%s1 + $0x118] sm:$0xff]
  %v56 = vld [vmem:[%s1 + $0x120] sm:$0xff]
  %v57 = vld [vmem:[%s1 + $0x128] sm:$0xff]
  %v58 = vld [vmem:[%s1 + $0x130] sm:$0xff]
  %v59 = vld [vmem:[%s1 + $0x138] sm:$0xff]
  %v60 = vld [vmem:[%s1 + $0x140] sm:$0xff]
  %v61 = vld [vmem:[%s1 + $0x148] sm:$0xff]
  %v62 = vld [vmem:[%s1 + $0x150] sm:$0xff]
  %v63 = vld [vmem:[%s1 + $0x158] sm:$0xff]
  %v64 = vld [vmem:[%s1 + $0x160] sm:$0xff]
  %v65 = vld [vmem:[%s1 + $0x168] sm:$0xff]
  %v66 = vld [vmem:[%s1 + $0x170] sm:$0xff]
  %v67 = vld [vmem:[%s1 + $0x178] sm:$0xff]
  %v68 = vld [vmem:[%s1 + $0x180] sm:$0xff]
  %v69 = vld [vmem:[%s1 + $0x188] sm:$0xff]
  %v70 = vld [vmem:[%s1 + $0x190] sm:$0xff]
  %v71 = vld [vmem:[%s1 + $0x198] sm:$0xff]
  %v72 = vld [vmem:[%s1 + $0x1a0] sm:$0xff]
  %v73 = vld [vmem:[%s1 + $0x1a8] sm:$0xff]
  %v74 = vld [vmem:[%s1 + $0x1b0] sm:$0xff]
  %v75 = vld [vmem:[%s1 + $0x1b8] sm:$0xff]
  %v76 = vld [vmem:[%s1 + $0x1c0] sm:$0xff]
  %v77 = vld [vmem:[%s1 + $0x1c8] sm:$0xff]
  %v78 = vld [vmem:[%s1 + $0x1d0] sm:$0xff]
  %v79 = vld [vmem:[%s1 + $0x1d8] sm:$0xff]
  %v80 = vld [vmem:[%s1 + $0x1e0] sm:$0xff]
  %v81 = vld [vmem:[%s1 + $0x1e8] sm:$0xff]
  %v82 = vld [vmem:[%s1 + $0x1f0] sm:$0xff]
  %v83 = vld [vmem:[%s1 + $0x1f8] sm:$0xff]
  %v84 = vld [vmem:[%s1 + $0x200] sm:$0xff]
  %v85 = vld [vmem:[%s1 + $0x208] sm:$0xff]
  %v86 = vld [vmem:[%s1 + $0x210] sm:$0xff]
  %v87 = vld [vmem:[%s1 + $0x218] sm:$0xff]
  %v88 = vld [vmem:[%s1 + $0x220] sm:$0xff]
  %v89 = vld [vmem:[%s1 + $0x228] sm:$0xff]
  %v90 = vld [vmem:[%s1 + $0x230] sm:$0xff]
  %v91 = vld [vmem:[%s1 + $0x238] sm:$0xff]
  %v92 = vld [vmem:[%s1 + $0x240] sm:$0xff]
  %v93 = vld [vmem:[%s1 + $0x248] sm:$0xff]
  %v94 = vld [vmem:[%s1 + $0x250] sm:$0xff]
  %v95 = vld [vmem:[%s1 + $0x258] sm:$0xff]
  %v96 = vld [vmem:[%s1 + $0x260] sm:$0xff]
  %v97 = vld [vmem:[%s1 + $0x268] sm:$0xff]
  %v98 = vld [vmem:[%s1 + $0x270] sm:$0xff]
  %v99 = vld [vmem:[%s1 + $0x278] sm:$0xff]
  %v100 = vld [vmem:[%s1 + $0x280] sm:$0xff]
  %v101 = vld [vmem:[%s1 + $0x288] sm:$0xff]
  %v102 = vld [vmem:[%s1 + $0x290] sm:$0xff]
  %v103 = vld [vmem:[%s1 + $0x298] sm:$0xff]
  %v104 = vld [vmem:[%s1 + $0x2a0] sm:$0xff]
  %v105 = vld [vmem:[%s1 + $0x2a8] sm:$0xff]
  %v106 = vld [vmem:[%s1 + $0x2b0] sm:$0xff]
  %v107 = vld [vmem:[%s1 + $0x2b8] sm:$0xff]
  %v108 = vld [vmem:[%s1 + $0x2c0] sm:$0xff]
  %v109 = vld [vmem:[%s1 + $0x2c8] sm:$0xff]
  %v110 = vld [vmem:[%s1 + $0x2d0] sm:$0xff]
  %v111 = vld [vmem:[%s1 + $0x2d8] sm:$0xff]
  %v112 = vld [vmem:[%s1 + $0x2e0] sm:$0xff]
  %v113 = vld [vmem:[%s1 + $0x2e8] sm:$0xff]
  %v114 = vld [vmem:[%s1 + $0x2f0] sm:$0xff]
  %v115 = vld [vmem:[%s1 + $0x2f8] sm:$0xff]
  %v116 = vld [vmem:[%s1 + $0x300] sm:$0xff]
  %v117 = vld [vmem:[%s1 + $0x308] sm:$0xff]
  %v118 = vld [vmem:[%s1 + $0x310] sm:$0xff]
  %v119 = vld [vmem:[%s1 + $0x318] sm:$0xff]
  %v120 = vld [vmem:[%s1 + $0x320] sm:$0xff]
  %v121 = vld [vmem:[%s1 + $0x328] sm:$0xff]
  %v122 = vld [vmem:[%s1 + $0x330] sm:$0xff]
  %v123 = vld [vmem:[%s1 + $0x338] sm:$0xff]
  %v124 = vld [vmem:[%s1 + $0x340] sm:$0xff]
  %v125 = vld [vmem:[%s1 + $0x348] sm:$0xff]
  %v126 = vld [vmem:[%s1 + $0x350] sm:$0xff]
  %v127 = vld [vmem:[%s1 + $0x358] sm:$0xff]
  %v128 = vld [vmem:[%s1 + $0x360] sm:$0xff]
  %v129 = vld [vmem:[%s1 + $0x368] sm:$0xff]
  %v130 = vld [vmem:[%s1 + $0x370] sm:$0xff]
  %v131 = vld [vmem:[%s1 + $0x378] sm:$0xff]
  %v132 = vld [vmem:[%s1 + $0x380] sm:$0xff]
  %v133 = vld [vmem:[%s1 + $0x388] sm:$0xff]
  %v134 = vld [vmem:[%s1 + $0x390] sm:$0xff]
  %v135 = vld [vmem:[%s1 + $0x398] sm:$0xff]
  %v136 = vld [vmem:[%s1 + $0x3a0] sm:$0xff]
  %v137 = vld [vmem:[%s1 + $0x3a8] sm:$0xff]
  %v138 = vld [vmem:[%s1 + $0x3b0] sm:$0xff]
  %v139 = vld [vmem:[%s1 + $0x3b8] sm:$0xff]
  %v140 = vld [vmem:[%s1 + $0x3c0] sm:$0xff]
  %v141 = vld [vmem:[%s1 + $0x3c8] sm:$0xff]
  %v142 = vld [vmem:[%s1 + $0x3d0] sm:$0xff]
  %v143 = vld [vmem:[%s1 + $0x3d8] sm:$0xff]
  %v144 = vld [vmem:[%s1 + $0x3e0] sm:$0xff]
  %v145 = vld [vmem:[%s1 + $0x3e8] sm:$0xff]
  %v146 = vld [vmem:[%s1 + $0x3f0] sm:$0xff]
  %v147 = vld [vmem:[%s1 + $0x3f8] sm:$0xff]
  %v148 = vld [vmem:[%s1 + $0x400] sm:$0xff]
  %v149 = vld [vmem:[%s1 + $0x408] sm:$0xff]
  %v150 = vld [vmem:[%s1 + $0x410] sm:$0xff]
  %v151 = vld [vmem:[%s1 + $0x418] sm:$0xff]
  %v152 = vld [vmem:[%s1 + $0x420] sm:$0xff]
  %v153 = vld [vmem:[%s1 + $0x428] sm:$0xff]
  %v154 = vld [vmem:[%s1 + $0x430] sm:$0xff]
  %v155 = vld [vmem:[%s1 + $0x438] sm:$0xff]
  %v156 = vld [vmem:[%s1 + $0x440] sm:$0xff]
  %v157 = vld [vmem:[%s1 + $0x448] sm:$0xff]
  %v158 = vld [vmem:[%s1 + $0x450] sm:$0xff]
  %v159 = vld [vmem:[%s1 + $0x458] sm:$0xff]
  %v160 = vld [vmem:[%s1 + $0x460] sm:$0xff]
  %v161 = vld [vmem:[%s1 + $0x468] sm:$0xff]
  %v162 = vld [vmem:[%s1 + $0x470] sm:$0xff]
  %v163 = vld [vmem:[%s1 + $0x478] sm:$0xff]
  %v164 = vld [vmem:[%s1 + $0x480] sm:$0xff]
  %v165 = vld [vmem:[%s1 + $0x488] sm:$0xff]
  %v166 = vld [vmem:[%s1 + $0x490] sm:$0xff]
  %v167 = vld [vmem:[%s1 + $0x498] sm:$0xff]
  %v168 = vld [vmem:[%s1 + $0x4a0] sm:$0xff]
  %v169 = vld [vmem:[%s1 + $0x4a8] sm:$0xff]
  %v170 = vld [vmem:[%s1 + $0x4b0] sm:$0xff]
  %v171 = vld [vmem:[%s1 + $0x4b8] sm:$0xff]
  %v172 = vld [vmem:[%s1 + $0x4c0] sm:$0xff]
  %v173 = vld [vmem:[%s1 + $0x4c8] sm:$0xff]
  %v174 = vld [vmem:[%s1 + $0x4d0] sm:$0xff]
  %v175 = vld [vmem:[%s1 + $0x4d8] sm:$0xff]
  %v176 = vld [vmem:[%s1 + $0x4e0] sm:$0xff]
  %v177 = vld [vmem:[%s1 + $0x4e8] sm:$0xff]
  %v178 = vld [vmem:[%s1 + $0x4f0] sm:$0xff]
  %v179 = vld [vmem:[%s1 + $0x4f8] sm:$0xff]
  %v180 = vld [vmem:[%s1 + $0x500] sm:$0xff]
  %v181 = vld [vmem:[%s1 + $0x508] sm:$0xff]
  %v182 = vld [vmem:[%s1 + $0x510] sm:$0xff]
  %v183 = vld [vmem:[%s1 + $0x518] sm:$0xff]
  %v184 = vld [vmem:[%s1 + $0x520] sm:$0xff]
  %v185 = vld [vmem:[%s1 + $0x528] sm:$0xff]
  %v186 = vld [vmem:[%s1 + $0x530] sm:$0xff]
  %v187 = vld [vmem:[%s1 + $0x538] sm:$0xff]
  %v188 = vld [vmem:[%s1 + $0x540] sm:$0xff]
  %v189 = vld [vmem:[%s1 + $0x548] sm:$0xff]
  %v190 = vld [vmem:[%s1 + $0x550] sm:$0xff]
  %v191 = vld [vmem:[%s1 + $0x558] sm:$0xff]
  %v192 = vld [vmem:[%s1 + $0x560] sm:$0xff]
  %v193 = vld [vmem:[%s1 + $0x568] sm:$0xff]
  %v194 = vld [vmem:[%s1 + $0x570] sm:$0xff]
  %v195 = vld [vmem:[%s1 + $0x578] sm:$0xff]
  %v196 = vld [vmem:[%s1 + $0x580] sm:$0xff]
  %v197 = vld [vmem:[%s1 + $0x588] sm:$0xff]
  %v198 = vld [vmem:[%s1 + $0x590] sm:$0xff]
  %v199 = vld [vmem:[%s1 + $0x598] sm:$0xff]
  %v200 = vld [vmem:[%s1 + $0x5a0] sm:$0xff]
  %v201 = vld [vmem:[%s1 + $0x5a8] sm:$0xff]
  %v202 = vld [vmem:[%s1 + $0x5b0] sm:$0xff]
  %v203 = vld [vmem:[%s1 + $0x5b8] sm:$0xff]
  %v204 = vld [vmem:[%s1 + $0x5c0] sm:$0xff]
  %v205 = vld [vmem:[%s1 + $0x5c8] sm:$0xff]
  %v206 = vld [vmem:[%s1 + $0x5d0] sm:$0xff]
  %v207 = vld [vmem:[%s1 + $0x5d8] sm:$0xff]
  %v208 = vld [vmem:[%s1 + $0x5e0] sm:$0xff]
  %v209 = vld [vmem:[%s1 + $0x5e8] sm:$0xff]
  %v210 = vld [vmem:[%s1 + $0x5f0] sm:$0xff]
  %v211 = vld [vmem:[%s1 + $0x5f8] sm:$0xff]
  %v212 = vld [vmem:[%s2] sm:$0xf]
  %v214 = vperm.slane %v212, 0
  %v215 = vperm.slane %v212, 1
  %v216 = vperm.slane %v212, 2
  %v217 = vperm.slane %v212, 3
  %v228 = vunpack.c.l.b16 %v14
  %v229 = vunpack.c.h.b16 %v14
  %v230 = vunpack.c.l.b16 %v15
  %v231 = vunpack.c.h.b16 %v15
  %v232 = vunpack.c.l.b16 %v16
  %v233 = vunpack.c.h.b16 %v16
  %v234 = vunpack.c.l.b16 %v17
  %v235 = vunpack.c.h.b16 %v17
  %v236 = vunpack.c.l.b16 %v18
  %v237 = vunpack.c.h.b16 %v18
  %v238 = vunpack.c.l.b16 %v19
  %v239 = vunpack.c.h.b16 %v19
  %v240 = vpack.c.b16 %v234, %v228
  %v241 = vpack.c.b16 %v235, %v229
  %v242 = vpack.c.b16 %v236, %v230
  %v243 = vpack.c.b16 %v237, %v231
  %v244 = vpack.c.b16 %v238, %v232
  %v245 = vpack.c.b16 %v239, %v233
  %v444 = vunpack.c.l.b16 %v20
  %v445 = vunpack.c.h.b16 %v20
  %v446 = vunpack.c.l.b16 %v21
  %v447 = vunpack.c.h.b16 %v21
  %v448 = vunpack.c.l.b16 %v22
  %v449 = vunpack.c.h.b16 %v22
  %v450 = vunpack.c.l.b16 %v23
  %v451 = vunpack.c.h.b16 %v23
  %v452 = vunpack.c.l.b16 %v24
  %v453 = vunpack.c.h.b16 %v24
  %v454 = vunpack.c.l.b16 %v25
  %v455 = vunpack.c.h.b16 %v25
  %v456 = vunpack.c.l.b16 %v26
  %v457 = vunpack.c.h.b16 %v26
  %v458 = vunpack.c.l.b16 %v27
  %v459 = vunpack.c.h.b16 %v27
  %v460 = vunpack.c.l.b16 %v28
  %v461 = vunpack.c.h.b16 %v28
  %v462 = vunpack.c.l.b16 %v29
  %v463 = vunpack.c.h.b16 %v29
  %v464 = vunpack.c.l.b16 %v30
  %v465 = vunpack.c.h.b16 %v30
  %v466 = vunpack.c.l.b16 %v31
  %v467 = vunpack.c.h.b16 %v31
  %v468 = vunpack.c.l.b16 %v32
  %v469 = vunpack.c.h.b16 %v32
  %v470 = vunpack.c.l.b16 %v33
  %v471 = vunpack.c.h.b16 %v33
  %v472 = vunpack.c.l.b16 %v34
  %v473 = vunpack.c.h.b16 %v34
  %v474 = vunpack.c.l.b16 %v35
  %v475 = vunpack.c.h.b16 %v35
  %v476 = vunpack.c.l.b16 %v36
  %v477 = vunpack.c.h.b16 %v36
  %v478 = vunpack.c.l.b16 %v37
  %v479 = vunpack.c.h.b16 %v37
  %v480 = vunpack.c.l.b16 %v38
  %v481 = vunpack.c.h.b16 %v38
  %v482 = vunpack.c.l.b16 %v39
  %v483 = vunpack.c.h.b16 %v39
  %v484 = vunpack.c.l.b16 %v40
  %v485 = vunpack.c.h.b16 %v40
  %v486 = vunpack.c.l.b16 %v41
  %v487 = vunpack.c.h.b16 %v41
  %v488 = vunpack.c.l.b16 %v42
  %v489 = vunpack.c.h.b16 %v42
  %v490 = vunpack.c.l.b16 %v43
  %v491 = vunpack.c.h.b16 %v43
  %v492 = vunpack.c.l.b16 %v44
  %v493 = vunpack.c.h.b16 %v44
  %v494 = vunpack.c.l.b16 %v45
  %v495 = vunpack.c.h.b16 %v45
  %v496 = vunpack.c.l.b16 %v46
  %v497 = vunpack.c.h.b16 %v46
  %v498 = vunpack.c.l.b16 %v47
  %v499 = vunpack.c.h.b16 %v47
  %v500 = vunpack.c.l.b16 %v48
  %v501 = vunpack.c.h.b16 %v48
  %v502 = vunpack.c.l.b16 %v49
  %v503 = vunpack.c.h.b16 %v49
  %v504 = vunpack.c.l.b16 %v50
  %v505 = vunpack.c.h.b16 %v50
  %v506 = vunpack.c.l.b16 %v51
  %v507 = vunpack.c.h.b16 %v51
  %v508 = vunpack.c.l.b16 %v52
  %v509 = vunpack.c.h.b16 %v52
  %v510 = vunpack.c.l.b16 %v53
  %v511 = vunpack.c.h.b16 %v53
  %v512 = vunpack.c.l.b16 %v54
  %v513 = vunpack.c.h.b16 %v54
  %v514 = vunpack.c.l.b16 %v55
  %v515 = vunpack.c.h.b16 %v55
  %v516 = vunpack.c.l.b16 %v56
  %v517 = vunpack.c.h.b16 %v56
  %v518 = vunpack.c.l.b16 %v57
  %v519 = vunpack.c.h.b16 %v57
  %v520 = vunpack.c.l.b16 %v58
  %v521 = vunpack.c.h.b16 %v58
  %v522 = vunpack.c.l.b16 %v59
  %v523 = vunpack.c.h.b16 %v59
  %v524 = vunpack.c.l.b16 %v60
  %v525 = vunpack.c.h.b16 %v60
  %v526 = vunpack.c.l.b16 %v61
  %v527 = vunpack.c.h.b16 %v61
  %v528 = vunpack.c.l.b16 %v62
  %v529 = vunpack.c.h.b16 %v62
  %v530 = vunpack.c.l.b16 %v63
  %v531 = vunpack.c.h.b16 %v63
  %v532 = vunpack.c.l.b16 %v64
  %v533 = vunpack.c.h.b16 %v64
  %v534 = vunpack.c.l.b16 %v65
  %v535 = vunpack.c.h.b16 %v65
  %v536 = vunpack.c.l.b16 %v66
  %v537 = vunpack.c.h.b16 %v66
  %v538 = vunpack.c.l.b16 %v67
  %v539 = vunpack.c.h.b16 %v67
  %v540 = vunpack.c.l.b16 %v68
  %v541 = vunpack.c.h.b16 %v68
  %v542 = vunpack.c.l.b16 %v69
  %v543 = vunpack.c.h.b16 %v69
  %v544 = vunpack.c.l.b16 %v70
  %v545 = vunpack.c.h.b16 %v70
  %v546 = vunpack.c.l.b16 %v71
  %v547 = vunpack.c.h.b16 %v71
  %v548 = vunpack.c.l.b16 %v72
  %v549 = vunpack.c.h.b16 %v72
  %v550 = vunpack.c.l.b16 %v73
  %v551 = vunpack.c.h.b16 %v73
  %v552 = vunpack.c.l.b16 %v74
  %v553 = vunpack.c.h.b16 %v74
  %v554 = vunpack.c.l.b16 %v75
  %v555 = vunpack.c.h.b16 %v75
  %v556 = vunpack.c.l.b16 %v76
  %v557 = vunpack.c.h.b16 %v76
  %v558 = vunpack.c.l.b16 %v77
  %v559 = vunpack.c.h.b16 %v77
  %v560 = vunpack.c.l.b16 %v78
  %v561 = vunpack.c.h.b16 %v78
  %v562 = vunpack.c.l.b16 %v79
  %v563 = vunpack.c.h.b16 %v79
  %v564 = vunpack.c.l.b16 %v80
  %v565 = vunpack.c.h.b16 %v80
  %v566 = vunpack.c.l.b16 %v81
  %v567 = vunpack.c.h.b16 %v81
  %v568 = vunpack.c.l.b16 %v82
  %v569 = vunpack.c.h.b16 %v82
  %v570 = vunpack.c.l.b16 %v83
  %v571 = vunpack.c.h.b16 %v83
  %v572 = vunpack.c.l.b16 %v84
  %v573 = vunpack.c.h.b16 %v84
  %v574 = vunpack.c.l.b16 %v85
  %v575 = vunpack.c.h.b16 %v85
  %v576 = vunpack.c.l.b16 %v86
  %v577 = vunpack.c.h.b16 %v86
  %v578 = vunpack.c.l.b16 %v87
  %v579 = vunpack.c.h.b16 %v87
  %v580 = vunpack.c.l.b16 %v88
  %v581 = vunpack.c.h.b16 %v88
  %v582 = vunpack.c.l.b16 %v89
  %v583 = vunpack.c.h.b16 %v89
  %v584 = vunpack.c.l.b16 %v90
  %v585 = vunpack.c.h.b16 %v90
  %v586 = vunpack.c.l.b16 %v91
  %v587 = vunpack.c.h.b16 %v91
  %v588 = vunpack.c.l.b16 %v92
  %v589 = vunpack.c.h.b16 %v92
  %v590 = vunpack.c.l.b16 %v93
  %v591 = vunpack.c.h.b16 %v93
  %v592 = vunpack.c.l.b16 %v94
  %v593 = vunpack.c.h.b16 %v94
  %v594 = vunpack.c.l.b16 %v95
  %v595 = vunpack.c.h.b16 %v95
  %v596 = vunpack.c.l.b16 %v96
  %v597 = vunpack.c.h.b16 %v96
  %v598 = vunpack.c.l.b16 %v97
  %v599 = vunpack.c.h.b16 %v97
  %v600 = vunpack.c.l.b16 %v98
  %v601 = vunpack.c.h.b16 %v98
  %v602 = vunpack.c.l.b16 %v99
  %v603 = vunpack.c.h.b16 %v99
  %v604 = vunpack.c.l.b16 %v100
  %v605 = vunpack.c.h.b16 %v100
  %v606 = vunpack.c.l.b16 %v101
  %v607 = vunpack.c.h.b16 %v101
  %v608 = vunpack.c.l.b16 %v102
  %v609 = vunpack.c.h.b16 %v102
  %v610 = vunpack.c.l.b16 %v103
  %v611 = vunpack.c.h.b16 %v103
  %v612 = vunpack.c.l.b16 %v104
  %v613 = vunpack.c.h.b16 %v104
  %v614 = vunpack.c.l.b16 %v105
  %v615 = vunpack.c.h.b16 %v105
  %v616 = vunpack.c.l.b16 %v106
  %v617 = vunpack.c.h.b16 %v106
  %v618 = vunpack.c.l.b16 %v107
  %v619 = vunpack.c.h.b16 %v107
  %v620 = vunpack.c.l.b16 %v108
  %v621 = vunpack.c.h.b16 %v108
  %v622 = vunpack.c.l.b16 %v109
  %v623 = vunpack.c.h.b16 %v109
  %v624 = vunpack.c.l.b16 %v110
  %v625 = vunpack.c.h.b16 %v110
  %v626 = vunpack.c.l.b16 %v111
  %v627 = vunpack.c.h.b16 %v111
  %v628 = vunpack.c.l.b16 %v112
  %v629 = vunpack.c.h.b16 %v112
  %v630 = vunpack.c.l.b16 %v113
  %v631 = vunpack.c.h.b16 %v113
  %v632 = vunpack.c.l.b16 %v114
  %v633 = vunpack.c.h.b16 %v114
  %v634 = vunpack.c.l.b16 %v115
  %v635 = vunpack.c.h.b16 %v115
  %v636 = vunpack.c.l.b16 %v116
  %v637 = vunpack.c.h.b16 %v116
  %v638 = vunpack.c.l.b16 %v117
  %v639 = vunpack.c.h.b16 %v117
  %v640 = vunpack.c.l.b16 %v118
  %v641 = vunpack.c.h.b16 %v118
  %v642 = vunpack.c.l.b16 %v119
  %v643 = vunpack.c.h.b16 %v119
  %v644 = vunpack.c.l.b16 %v120
  %v645 = vunpack.c.h.b16 %v120
  %v646 = vunpack.c.l.b16 %v121
  %v647 = vunpack.c.h.b16 %v121
  %v648 = vunpack.c.l.b16 %v122
  %v649 = vunpack.c.h.b16 %v122
  %v650 = vunpack.c.l.b16 %v123
  %v651 = vunpack.c.h.b16 %v123
  %v652 = vunpack.c.l.b16 %v124
  %v653 = vunpack.c.h.b16 %v124
  %v654 = vunpack.c.l.b16 %v125
  %v655 = vunpack.c.h.b16 %v125
  %v656 = vunpack.c.l.b16 %v126
  %v657 = vunpack.c.h.b16 %v126
  %v658 = vunpack.c.l.b16 %v127
  %v659 = vunpack.c.h.b16 %v127
  %v660 = vunpack.c.l.b16 %v128
  %v661 = vunpack.c.h.b16 %v128
  %v662 = vunpack.c.l.b16 %v129
  %v663 = vunpack.c.h.b16 %v129
  %v664 = vunpack.c.l.b16 %v130
  %v665 = vunpack.c.h.b16 %v130
  %v666 = vunpack.c.l.b16 %v131
  %v667 = vunpack.c.h.b16 %v131
  %v668 = vunpack.c.l.b16 %v132
  %v669 = vunpack.c.h.b16 %v132
  %v670 = vunpack.c.l.b16 %v133
  %v671 = vunpack.c.h.b16 %v133
  %v672 = vunpack.c.l.b16 %v134
  %v673 = vunpack.c.h.b16 %v134
  %v674 = vunpack.c.l.b16 %v135
  %v675 = vunpack.c.h.b16 %v135
  %v676 = vunpack.c.l.b16 %v136
  %v677 = vunpack.c.h.b16 %v136
  %v678 = vunpack.c.l.b16 %v137
  %v679 = vunpack.c.h.b16 %v137
  %v680 = vunpack.c.l.b16 %v138
  %v681 = vunpack.c.h.b16 %v138
  %v682 = vunpack.c.l.b16 %v139
  %v683 = vunpack.c.h.b16 %v139
  %v684 = vunpack.c.l.b16 %v140
  %v685 = vunpack.c.h.b16 %v140
  %v686 = vunpack.c.l.b16 %v141
  %v687 = vunpack.c.h.b16 %v141
  %v688 = vunpack.c.l.b16 %v142
  %v689 = vunpack.c.h.b16 %v142
  %v690 = vunpack.c.l.b16 %v143
  %v691 = vunpack.c.h.b16 %v143
  %v692 = vunpack.c.l.b16 %v144
  %v693 = vunpack.c.h.b16 %v144
  %v694 = vunpack.c.l.b16 %v145
  %v695 = vunpack.c.h.b16 %v145
  %v696 = vunpack.c.l.b16 %v146
  %v697 = vunpack.c.h.b16 %v146
  %v698 = vunpack.c.l.b16 %v147
  %v699 = vunpack.c.h.b16 %v147
  %v700 = vunpack.c.l.b16 %v148
  %v701 = vunpack.c.h.b16 %v148
  %v702 = vunpack.c.l.b16 %v149
  %v703 = vunpack.c.h.b16 %v149
  %v704 = vunpack.c.l.b16 %v150
  %v705 = vunpack.c.h.b16 %v150
  %v706 = vunpack.c.l.b16 %v151
  %v707 = vunpack.c.h.b16 %v151
  %v708 = vunpack.c.l.b16 %v152
  %v709 = vunpack.c.h.b16 %v152
  %v710 = vunpack.c.l.b16 %v153
  %v711 = vunpack.c.h.b16 %v153
  %v712 = vunpack.c.l.b16 %v154
  %v713 = vunpack.c.h.b16 %v154
  %v714 = vunpack.c.l.b16 %v155
  %v715 = vunpack.c.h.b16 %v155
  %v716 = vunpack.c.l.b16 %v156
  %v717 = vunpack.c.h.b16 %v156
  %v718 = vunpack.c.l.b16 %v157
  %v719 = vunpack.c.h.b16 %v157
  %v720 = vunpack.c.l.b16 %v158
  %v721 = vunpack.c.h.b16 %v158
  %v722 = vunpack.c.l.b16 %v159
  %v723 = vunpack.c.h.b16 %v159
  %v724 = vunpack.c.l.b16 %v160
  %v725 = vunpack.c.h.b16 %v160
  %v726 = vunpack.c.l.b16 %v161
  %v727 = vunpack.c.h.b16 %v161
  %v728 = vunpack.c.l.b16 %v162
  %v729 = vunpack.c.h.b16 %v162
  %v730 = vunpack.c.l.b16 %v163
  %v731 = vunpack.c.h.b16 %v163
  %v732 = vunpack.c.l.b16 %v164
  %v733 = vunpack.c.h.b16 %v164
  %v734 = vunpack.c.l.b16 %v165
  %v735 = vunpack.c.h.b16 %v165
  %v736 = vunpack.c.l.b16 %v166
  %v737 = vunpack.c.h.b16 %v166
  %v738 = vunpack.c.l.b16 %v167
  %v739 = vunpack.c.h.b16 %v167
  %v740 = vunpack.c.l.b16 %v168
  %v741 = vunpack.c.h.b16 %v168
  %v742 = vunpack.c.l.b16 %v169
  %v743 = vunpack.c.h.b16 %v169
  %v744 = vunpack.c.l.b16 %v170
  %v745 = vunpack.c.h.b16 %v170
  %v746 = vunpack.c.l.b16 %v171
  %v747 = vunpack.c.h.b16 %v171
  %v748 = vunpack.c.l.b16 %v172
  %v749 = vunpack.c.h.b16 %v172
  %v750 = vunpack.c.l.b16 %v173
  %v751 = vunpack.c.h.b16 %v173
  %v752 = vunpack.c.l.b16 %v174
  %v753 = vunpack.c.h.b16 %v174
  %v754 = vunpack.c.l.b16 %v175
  %v755 = vunpack.c.h.b16 %v175
  %v756 = vunpack.c.l.b16 %v176
  %v757 = vunpack.c.h.b16 %v176
  %v758 = vunpack.c.l.b16 %v177
  %v759 = vunpack.c.h.b16 %v177
  %v760 = vunpack.c.l.b16 %v178
  %v761 = vunpack.c.h.b16 %v178
  %v762 = vunpack.c.l.b16 %v179
  %v763 = vunpack.c.h.b16 %v179
  %v764 = vunpack.c.l.b16 %v180
  %v765 = vunpack.c.h.b16 %v180
  %v766 = vunpack.c.l.b16 %v181
  %v767 = vunpack.c.h.b16 %v181
  %v768 = vunpack.c.l.b16 %v182
  %v769 = vunpack.c.h.b16 %v182
  %v770 = vunpack.c.l.b16 %v183
  %v771 = vunpack.c.h.b16 %v183
  %v772 = vunpack.c.l.b16 %v184
  %v773 = vunpack.c.h.b16 %v184
  %v774 = vunpack.c.l.b16 %v185
  %v775 = vunpack.c.h.b16 %v185
  %v776 = vunpack.c.l.b16 %v186
  %v777 = vunpack.c.h.b16 %v186
  %v778 = vunpack.c.l.b16 %v187
  %v779 = vunpack.c.h.b16 %v187
  %v780 = vunpack.c.l.b16 %v188
  %v781 = vunpack.c.h.b16 %v188
  %v782 = vunpack.c.l.b16 %v189
  %v783 = vunpack.c.h.b16 %v189
  %v784 = vunpack.c.l.b16 %v190
  %v785 = vunpack.c.h.b16 %v190
  %v786 = vunpack.c.l.b16 %v191
  %v787 = vunpack.c.h.b16 %v191
  %v788 = vunpack.c.l.b16 %v192
  %v789 = vunpack.c.h.b16 %v192
  %v790 = vunpack.c.l.b16 %v193
  %v791 = vunpack.c.h.b16 %v193
  %v792 = vunpack.c.l.b16 %v194
  %v793 = vunpack.c.h.b16 %v194
  %v794 = vunpack.c.l.b16 %v195
  %v795 = vunpack.c.h.b16 %v195
  %v796 = vunpack.c.l.b16 %v196
  %v797 = vunpack.c.h.b16 %v196
  %v798 = vunpack.c.l.b16 %v197
  %v799 = vunpack.c.h.b16 %v197
  %v800 = vunpack.c.l.b16 %v198
  %v801 = vunpack.c.h.b16 %v198
  %v802 = vunpack.c.l.b16 %v199
  %v803 = vunpack.c.h.b16 %v199
  %v804 = vunpack.c.l.b16 %v200
  %v805 = vunpack.c.h.b16 %v200
  %v806 = vunpack.c.l.b16 %v201
  %v807 = vunpack.c.h.b16 %v201
  %v808 = vunpack.c.l.b16 %v202
  %v809 = vunpack.c.h.b16 %v202
  %v810 = vunpack.c.l.b16 %v203
  %v811 = vunpack.c.h.b16 %v203
  %v812 = vunpack.c.l.b16 %v204
  %v813 = vunpack.c.h.b16 %v204
  %v814 = vunpack.c.l.b16 %v205
  %v815 = vunpack.c.h.b16 %v205
  %v816 = vunpack.c.l.b16 %v206
  %v817 = vunpack.c.h.b16 %v206
  %v818 = vunpack.c.l.b16 %v207
  %v819 = vunpack.c.h.b16 %v207
  %v820 = vunpack.c.l.b16 %v208
  %v821 = vunpack.c.h.b16 %v208
  %v822 = vunpack.c.l.b16 %v209
  %v823 = vunpack.c.h.b16 %v209
  %v824 = vunpack.c.l.b16 %v210
  %v825 = vunpack.c.h.b16 %v210
  %v826 = vunpack.c.l.b16 %v211
  %v827 = vunpack.c.h.b16 %v211
  %v828 = vpack.c.b16 %v448, %v444
  %v829 = vpack.c.b16 %v449, %v445
  %v830 = vpack.c.b16 %v450, %v446
  %v831 = vpack.c.b16 %v451, %v447
  %v832 = vpack.c.b16 %v456, %v452
  %v833 = vpack.c.b16 %v457, %v453
  %v834 = vpack.c.b16 %v458, %v454
  %v835 = vpack.c.b16 %v459, %v455
  %v836 = vpack.c.b16 %v464, %v460
  %v837 = vpack.c.b16 %v465, %v461
  %v838 = vpack.c.b16 %v466, %v462
  %v839 = vpack.c.b16 %v467, %v463
  %v840 = vpack.c.b16 %v472, %v468
  %v841 = vpack.c.b16 %v473, %v469
  %v842 = vpack.c.b16 %v474, %v470
  %v843 = vpack.c.b16 %v475, %v471
  %v844 = vpack.c.b16 %v480, %v476
  %v845 = vpack.c.b16 %v481, %v477
  %v846 = vpack.c.b16 %v482, %v478
  %v847 = vpack.c.b16 %v483, %v479
  %v848 = vpack.c.b16 %v488, %v484
  %v849 = vpack.c.b16 %v489, %v485
  %v850 = vpack.c.b16 %v490, %v486
  %v851 = vpack.c.b16 %v491, %v487
  %v852 = vpack.c.b16 %v496, %v492
  %v853 = vpack.c.b16 %v497, %v493
  %v854 = vpack.c.b16 %v498, %v494
  %v855 = vpack.c.b16 %v499, %v495
  %v856 = vpack.c.b16 %v504, %v500
  %v857 = vpack.c.b16 %v505, %v501
  %v858 = vpack.c.b16 %v506, %v502
  %v859 = vpack.c.b16 %v507, %v503
  %v860 = vpack.c.b16 %v512, %v508
  %v861 = vpack.c.b16 %v513, %v509
  %v862 = vpack.c.b16 %v514, %v510
  %v863 = vpack.c.b16 %v515, %v511
  %v864 = vpack.c.b16 %v520, %v516
  %v865 = vpack.c.b16 %v521, %v517
  %v866 = vpack.c.b16 %v522, %v518
  %v867 = vpack.c.b16 %v523, %v519
  %v868 = vpack.c.b16 %v528, %v524
  %v869 = vpack.c.b16 %v529, %v525
  %v870 = vpack.c.b16 %v530, %v526
  %v871 = vpack.c.b16 %v531, %v527
  %v872 = vpack.c.b16 %v536, %v532
  %v873 = vpack.c.b16 %v537, %v533
  %v874 = vpack.c.b16 %v538, %v534
  %v875 = vpack.c.b16 %v539, %v535
  %v876 = vpack.c.b16 %v544, %v540
  %v877 = vpack.c.b16 %v545, %v541
  %v878 = vpack.c.b16 %v546, %v542
  %v879 = vpack.c.b16 %v547, %v543
  %v880 = vpack.c.b16 %v552, %v548
  %v881 = vpack.c.b16 %v553, %v549
  %v882 = vpack.c.b16 %v554, %v550
  %v883 = vpack.c.b16 %v555, %v551
  %v884 = vpack.c.b16 %v560, %v556
  %v885 = vpack.c.b16 %v561, %v557
  %v886 = vpack.c.b16 %v562, %v558
  %v887 = vpack.c.b16 %v563, %v559
  %v888 = vpack.c.b16 %v568, %v564
  %v889 = vpack.c.b16 %v569, %v565
  %v890 = vpack.c.b16 %v570, %v566
  %v891 = vpack.c.b16 %v571, %v567
  %v892 = vpack.c.b16 %v576, %v572
  %v893 = vpack.c.b16 %v577, %v573
  %v894 = vpack.c.b16 %v578, %v574
  %v895 = vpack.c.b16 %v579, %v575
  %v896 = vpack.c.b16 %v584, %v580
  %v897 = vpack.c.b16 %v585, %v581
  %v898 = vpack.c.b16 %v586, %v582
  %v899 = vpack.c.b16 %v587, %v583
  %v900 = vpack.c.b16 %v592, %v588
  %v901 = vpack.c.b16 %v593, %v589
  %v902 = vpack.c.b16 %v594, %v590
  %v903 = vpack.c.b16 %v595, %v591
  %v904 = vpack.c.b16 %v600, %v596
  %v905 = vpack.c.b16 %v601, %v597
  %v906 = vpack.c.b16 %v602, %v598
  %v907 = vpack.c.b16 %v603, %v599
  %v908 = vpack.c.b16 %v608, %v604
  %v909 = vpack.c.b16 %v609, %v605
  %v910 = vpack.c.b16 %v610, %v606
  %v911 = vpack.c.b16 %v611, %v607
  %v912 = vpack.c.b16 %v616, %v612
  %v913 = vpack.c.b16 %v617, %v613
  %v914 = vpack.c.b16 %v618, %v614
  %v915 = vpack.c.b16 %v619, %v615
  %v916 = vpack.c.b16 %v624, %v620
  %v917 = vpack.c.b16 %v625, %v621
  %v918 = vpack.c.b16 %v626, %v622
  %v919 = vpack.c.b16 %v627, %v623
  %v920 = vpack.c.b16 %v632, %v628
  %v921 = vpack.c.b16 %v633, %v629
  %v922 = vpack.c.b16 %v634, %v630
  %v923 = vpack.c.b16 %v635, %v631
  %v924 = vpack.c.b16 %v640, %v636
  %v925 = vpack.c.b16 %v641, %v637
  %v926 = vpack.c.b16 %v642, %v638
  %v927 = vpack.c.b16 %v643, %v639
  %v928 = vpack.c.b16 %v648, %v644
  %v929 = vpack.c.b16 %v649, %v645
  %v930 = vpack.c.b16 %v650, %v646
  %v931 = vpack.c.b16 %v651, %v647
  %v932 = vpack.c.b16 %v656, %v652
  %v933 = vpack.c.b16 %v657, %v653
  %v934 = vpack.c.b16 %v658, %v654
  %v935 = vpack.c.b16 %v659, %v655
  %v936 = vpack.c.b16 %v664, %v660
  %v937 = vpack.c.b16 %v665, %v661
  %v938 = vpack.c.b16 %v666, %v662
  %v939 = vpack.c.b16 %v667, %v663
  %v940 = vpack.c.b16 %v672, %v668
  %v941 = vpack.c.b16 %v673, %v669
  %v942 = vpack.c.b16 %v674, %v670
  %v943 = vpack.c.b16 %v675, %v671
  %v944 = vpack.c.b16 %v680, %v676
  %v945 = vpack.c.b16 %v681, %v677
  %v946 = vpack.c.b16 %v682, %v678
  %v947 = vpack.c.b16 %v683, %v679
  %v948 = vpack.c.b16 %v688, %v684
  %v949 = vpack.c.b16 %v689, %v685
  %v950 = vpack.c.b16 %v690, %v686
  %v951 = vpack.c.b16 %v691, %v687
  %v952 = vpack.c.b16 %v696, %v692
  %v953 = vpack.c.b16 %v697, %v693
  %v954 = vpack.c.b16 %v698, %v694
  %v955 = vpack.c.b16 %v699, %v695
  %v956 = vpack.c.b16 %v704, %v700
  %v957 = vpack.c.b16 %v705, %v701
  %v958 = vpack.c.b16 %v706, %v702
  %v959 = vpack.c.b16 %v707, %v703
  %v960 = vpack.c.b16 %v712, %v708
  %v961 = vpack.c.b16 %v713, %v709
  %v962 = vpack.c.b16 %v714, %v710
  %v963 = vpack.c.b16 %v715, %v711
  %v964 = vpack.c.b16 %v720, %v716
  %v965 = vpack.c.b16 %v721, %v717
  %v966 = vpack.c.b16 %v722, %v718
  %v967 = vpack.c.b16 %v723, %v719
  %v968 = vpack.c.b16 %v728, %v724
  %v969 = vpack.c.b16 %v729, %v725
  %v970 = vpack.c.b16 %v730, %v726
  %v971 = vpack.c.b16 %v731, %v727
  %v972 = vpack.c.b16 %v736, %v732
  %v973 = vpack.c.b16 %v737, %v733
  %v974 = vpack.c.b16 %v738, %v734
  %v975 = vpack.c.b16 %v739, %v735
  %v976 = vpack.c.b16 %v744, %v740
  %v977 = vpack.c.b16 %v745, %v741
  %v978 = vpack.c.b16 %v746, %v742
  %v979 = vpack.c.b16 %v747, %v743
  %v980 = vpack.c.b16 %v752, %v748
  %v981 = vpack.c.b16 %v753, %v749
  %v982 = vpack.c.b16 %v754, %v750
  %v983 = vpack.c.b16 %v755, %v751
  %v984 = vpack.c.b16 %v760, %v756
  %v985 = vpack.c.b16 %v761, %v757
  %v986 = vpack.c.b16 %v762, %v758
  %v987 = vpack.c.b16 %v763, %v759
  %v988 = vpack.c.b16 %v768, %v764
  %v989 = vpack.c.b16 %v769, %v765
  %v990 = vpack.c.b16 %v770, %v766
  %v991 = vpack.c.b16 %v771, %v767
  %v992 = vpack.c.b16 %v776, %v772
  %v993 = vpack.c.b16 %v777, %v773
  %v994 = vpack.c.b16 %v778, %v774
  %v995 = vpack.c.b16 %v779, %v775
  %v996 = vpack.c.b16 %v784, %v780
  %v997 = vpack.c.b16 %v785, %v781
  %v998 = vpack.c.b16 %v786, %v782
  %v999 = vpack.c.b16 %v787, %v783
  %v1000 = vpack.c.b16 %v792, %v788
  %v1001 = vpack.c.b16 %v793, %v789
  %v1002 = vpack.c.b16 %v794, %v790
  %v1003 = vpack.c.b16 %v795, %v791
  %v1004 = vpack.c.b16 %v800, %v796
  %v1005 = vpack.c.b16 %v801, %v797
  %v1006 = vpack.c.b16 %v802, %v798
  %v1007 = vpack.c.b16 %v803, %v799
  %v1008 = vpack.c.b16 %v808, %v804
  %v1009 = vpack.c.b16 %v809, %v805
  %v1010 = vpack.c.b16 %v810, %v806
  %v1011 = vpack.c.b16 %v811, %v807
  %v1012 = vpack.c.b16 %v816, %v812
  %v1013 = vpack.c.b16 %v817, %v813
  %v1014 = vpack.c.b16 %v818, %v814
  %v1015 = vpack.c.b16 %v819, %v815
  %v1016 = vpack.c.b16 %v824, %v820
  %v1017 = vpack.c.b16 %v825, %v821
  %v1018 = vpack.c.b16 %v826, %v822
  %v1019 = vpack.c.b16 %v827, %v823
  %1212 = vmatpush.bf16.msra.mxu0 %v856
  %1213 = vmatpush.bf16.msra.mxu0 %v852
  %1214 = vmatpush.bf16.msra.mxu0 %v848
  %1215 = vmatpush.bf16.msra.mxu0 %v844
  %1216 = vmatpush.bf16.msra.mxu0 %v840
  %1217 = vmatpush.bf16.msra.mxu0 %v836
  %1218 = vmatpush.bf16.msra.mxu0 %v832
  %1219 = vmatpush.bf16.msra.mxu0 %v828
  %1220 = vmatmul.bf16.gmra.mxu0 %v240
  %v1221 = vpop.f32.mrf.mxu0
  %v1222 = vadd.f32 %v214, %v1221
  %v1223 = vpop.f32.mrf.mxu0
  %v1224 = vadd.f32 %v214, %v1223
  %1225 = vdwg.mxu0
  %1226 = vmatpush.bf16.msra.mxu0 %v888
  %1227 = vmatpush.bf16.msra.mxu0 %v884
  %1228 = vmatpush.bf16.msra.mxu0 %v880
  %1229 = vmatpush.bf16.msra.mxu0 %v876
  %1230 = vmatpush.bf16.msra.mxu0 %v872
  %1231 = vmatpush.bf16.msra.mxu0 %v868
  %1232 = vmatpush.bf16.msra.mxu0 %v864
  %1233 = vmatpush.bf16.msra.mxu0 %v860
  %1234 = vmatmul.bf16.gmra.mxu0 %v241
  %v1235 = vpop.f32.mrf.mxu0
  %v1236 = vadd.f32 %v1222, %v1235
  %v1237 = vpop.f32.mrf.mxu0
  %v1238 = vadd.f32 %v1224, %v1237
  %1239 = vdwg.mxu0
  %1240 = vmatpush.bf16.msra.mxu0 %v920
  %1241 = vmatpush.bf16.msra.mxu0 %v916
  %1242 = vmatpush.bf16.msra.mxu0 %v912
  %1243 = vmatpush.bf16.msra.mxu0 %v908
  %1244 = vmatpush.bf16.msra.mxu0 %v904
  %1245 = vmatpush.bf16.msra.mxu0 %v900
  %1246 = vmatpush.bf16.msra.mxu0 %v896
  %1247 = vmatpush.bf16.msra.mxu0 %v892
  %1248 = vmatmul.bf16.gmra.mxu0 %v242
  %v1249 = vpop.f32.mrf.mxu0
  %v1250 = vadd.f32 %v1236, %v1249
  %v1251 = vpop.f32.mrf.mxu0
  %v1252 = vadd.f32 %v1238, %v1251
  %1253 = vdwg.mxu0
  %1254 = vmatpush.bf16.msra.mxu0 %v952
  %1255 = vmatpush.bf16.msra.mxu0 %v948
  %1256 = vmatpush.bf16.msra.mxu0 %v944
  %1257 = vmatpush.bf16.msra.mxu0 %v940
  %1258 = vmatpush.bf16.msra.mxu0 %v936
  %1259 = vmatpush.bf16.msra.mxu0 %v932
  %1260 = vmatpush.bf16.msra.mxu0 %v928
  %1261 = vmatpush.bf16.msra.mxu0 %v924
  %1262 = vmatmul.bf16.gmra.mxu0 %v243
  %v1263 = vpop.f32.mrf.mxu0
  %v1264 = vadd.f32 %v1250, %v1263
  %v1265 = vpop.f32.mrf.mxu0
  %v1266 = vadd.f32 %v1252, %v1265
  %1267 = vdwg.mxu0
  %1268 = vmatpush.bf16.msra.mxu0 %v984
  %1269 = vmatpush.bf16.msra.mxu0 %v980
  %1270 = vmatpush.bf16.msra.mxu0 %v976
  %1271 = vmatpush.bf16.msra.mxu0 %v972
  %1272 = vmatpush.bf16.msra.mxu0 %v968
  %1273 = vmatpush.bf16.msra.mxu0 %v964
  %1274 = vmatpush.bf16.msra.mxu0 %v960
  %1275 = vmatpush.bf16.msra.mxu0 %v956
  %1276 = vmatmul.bf16.gmra.mxu0 %v244
  %v1277 = vpop.f32.mrf.mxu0
  %v1278 = vadd.f32 %v1264, %v1277
  %v1279 = vpop.f32.mrf.mxu0
  %v1280 = vadd.f32 %v1266, %v1279
  %1281 = vdwg.mxu0
  %1282 = vmatpush.bf16.msra.mxu0 %v1016
  %1283 = vmatpush.bf16.msra.mxu0 %v1012
  %1284 = vmatpush.bf16.msra.mxu0 %v1008
  %1285 = vmatpush.bf16.msra.mxu0 %v1004
  %1286 = vmatpush.bf16.msra.mxu0 %v1000
  %1287 = vmatpush.bf16.msra.mxu0 %v996
  %1288 = vmatpush.bf16.msra.mxu0 %v992
  %1289 = vmatpush.bf16.msra.mxu0 %v988
  %1290 = vmatmul.bf16.gmra.mxu0 %v245
  %v1291 = vpop.f32.mrf.mxu0
  %v1292 = vadd.f32 %v1278, %v1291
  %v1293 = vpop.f32.mrf.mxu0
  %v1294 = vadd.f32 %v1280, %v1293
  %1295 = vdwg.mxu0
  %1296 = vmatpush.bf16.msra.mxu0 %v857
  %1297 = vmatpush.bf16.msra.mxu0 %v853
  %1298 = vmatpush.bf16.msra.mxu0 %v849
  %1299 = vmatpush.bf16.msra.mxu0 %v845
  %1300 = vmatpush.bf16.msra.mxu0 %v841
  %1301 = vmatpush.bf16.msra.mxu0 %v837
  %1302 = vmatpush.bf16.msra.mxu0 %v833
  %1303 = vmatpush.bf16.msra.mxu0 %v829
  %1304 = vmatmul.bf16.gmra.mxu0 %v240
  %v1305 = vpop.f32.mrf.mxu0
  %v1306 = vadd.f32 %v215, %v1305
  %v1307 = vpop.f32.mrf.mxu0
  %v1308 = vadd.f32 %v215, %v1307
  %1309 = vdwg.mxu0
  %1310 = vmatpush.bf16.msra.mxu0 %v889
  %1311 = vmatpush.bf16.msra.mxu0 %v885
  %1312 = vmatpush.bf16.msra.mxu0 %v881
  %1313 = vmatpush.bf16.msra.mxu0 %v877
  %1314 = vmatpush.bf16.msra.mxu0 %v873
  %1315 = vmatpush.bf16.msra.mxu0 %v869
  %1316 = vmatpush.bf16.msra.mxu0 %v865
  %1317 = vmatpush.bf16.msra.mxu0 %v861
  %1318 = vmatmul.bf16.gmra.mxu0 %v241
  %v1319 = vpop.f32.mrf.mxu0
  %v1320 = vadd.f32 %v1306, %v1319
  %v1321 = vpop.f32.mrf.mxu0
  %v1322 = vadd.f32 %v1308, %v1321
  %1323 = vdwg.mxu0
  %1324 = vmatpush.bf16.msra.mxu0 %v921
  %1325 = vmatpush.bf16.msra.mxu0 %v917
  %1326 = vmatpush.bf16.msra.mxu0 %v913
  %1327 = vmatpush.bf16.msra.mxu0 %v909
  %1328 = vmatpush.bf16.msra.mxu0 %v905
  %1329 = vmatpush.bf16.msra.mxu0 %v901
  %1330 = vmatpush.bf16.msra.mxu0 %v897
  %1331 = vmatpush.bf16.msra.mxu0 %v893
  %1332 = vmatmul.bf16.gmra.mxu0 %v242
  %v1333 = vpop.f32.mrf.mxu0
  %v1334 = vadd.f32 %v1320, %v1333
  %v1335 = vpop.f32.mrf.mxu0
  %v1336 = vadd.f32 %v1322, %v1335
  %1337 = vdwg.mxu0
  %1338 = vmatpush.bf16.msra.mxu0 %v953
  %1339 = vmatpush.bf16.msra.mxu0 %v949
  %1340 = vmatpush.bf16.msra.mxu0 %v945
  %1341 = vmatpush.bf16.msra.mxu0 %v941
  %1342 = vmatpush.bf16.msra.mxu0 %v937
  %1343 = vmatpush.bf16.msra.mxu0 %v933
  %1344 = vmatpush.bf16.msra.mxu0 %v929
  %1345 = vmatpush.bf16.msra.mxu0 %v925
  %1346 = vmatmul.bf16.gmra.mxu0 %v243
  %v1347 = vpop.f32.mrf.mxu0
  %v1348 = vadd.f32 %v1334, %v1347
  %v1349 = vpop.f32.mrf.mxu0
  %v1350 = vadd.f32 %v1336, %v1349
  %1351 = vdwg.mxu0
  %1352 = vmatpush.bf16.msra.mxu0 %v985
  %1353 = vmatpush.bf16.msra.mxu0 %v981
  %1354 = vmatpush.bf16.msra.mxu0 %v977
  %1355 = vmatpush.bf16.msra.mxu0 %v973
  %1356 = vmatpush.bf16.msra.mxu0 %v969
  %1357 = vmatpush.bf16.msra.mxu0 %v965
  %1358 = vmatpush.bf16.msra.mxu0 %v961
  %1359 = vmatpush.bf16.msra.mxu0 %v957
  %1360 = vmatmul.bf16.gmra.mxu0 %v244
  %v1361 = vpop.f32.mrf.mxu0
  %v1362 = vadd.f32 %v1348, %v1361
  %v1363 = vpop.f32.mrf.mxu0
  %v1364 = vadd.f32 %v1350, %v1363
  %1365 = vdwg.mxu0
  %1366 = vmatpush.bf16.msra.mxu0 %v1017
  %1367 = vmatpush.bf16.msra.mxu0 %v1013
  %1368 = vmatpush.bf16.msra.mxu0 %v1009
  %1369 = vmatpush.bf16.msra.mxu0 %v1005
  %1370 = vmatpush.bf16.msra.mxu0 %v1001
  %1371 = vmatpush.bf16.msra.mxu0 %v997
  %1372 = vmatpush.bf16.msra.mxu0 %v993
  %1373 = vmatpush.bf16.msra.mxu0 %v989
  %1374 = vmatmul.bf16.gmra.mxu0 %v245
  %v1375 = vpop.f32.mrf.mxu0
  %v1376 = vadd.f32 %v1362, %v1375
  %v1377 = vpop.f32.mrf.mxu0
  %v1378 = vadd.f32 %v1364, %v1377
  %1379 = vdwg.mxu0
  %1380 = vmatpush.bf16.msra.mxu0 %v858
  %1381 = vmatpush.bf16.msra.mxu0 %v854
  %1382 = vmatpush.bf16.msra.mxu0 %v850
  %1383 = vmatpush.bf16.msra.mxu0 %v846
  %1384 = vmatpush.bf16.msra.mxu0 %v842
  %1385 = vmatpush.bf16.msra.mxu0 %v838
  %1386 = vmatpush.bf16.msra.mxu0 %v834
  %1387 = vmatpush.bf16.msra.mxu0 %v830
  %1388 = vmatmul.bf16.gmra.mxu0 %v240
  %v1389 = vpop.f32.mrf.mxu0
  %v1390 = vadd.f32 %v216, %v1389
  %v1391 = vpop.f32.mrf.mxu0
  %v1392 = vadd.f32 %v216, %v1391
  %1393 = vdwg.mxu0
  %1394 = vmatpush.bf16.msra.mxu0 %v890
  %1395 = vmatpush.bf16.msra.mxu0 %v886
  %1396 = vmatpush.bf16.msra.mxu0 %v882
  %1397 = vmatpush.bf16.msra.mxu0 %v878
  %1398 = vmatpush.bf16.msra.mxu0 %v874
  %1399 = vmatpush.bf16.msra.mxu0 %v870
  %1400 = vmatpush.bf16.msra.mxu0 %v866
  %1401 = vmatpush.bf16.msra.mxu0 %v862
  %1402 = vmatmul.bf16.gmra.mxu0 %v241
  %v1403 = vpop.f32.mrf.mxu0
  %v1404 = vadd.f32 %v1390, %v1403
  %v1405 = vpop.f32.mrf.mxu0
  %v1406 = vadd.f32 %v1392, %v1405
  %1407 = vdwg.mxu0
  %1408 = vmatpush.bf16.msra.mxu0 %v922
  %1409 = vmatpush.bf16.msra.mxu0 %v918
  %1410 = vmatpush.bf16.msra.mxu0 %v914
  %1411 = vmatpush.bf16.msra.mxu0 %v910
  %1412 = vmatpush.bf16.msra.mxu0 %v906
  %1413 = vmatpush.bf16.msra.mxu0 %v902
  %1414 = vmatpush.bf16.msra.mxu0 %v898
  %1415 = vmatpush.bf16.msra.mxu0 %v894
  %1416 = vmatmul.bf16.gmra.mxu0 %v242
  %v1417 = vpop.f32.mrf.mxu0
  %v1418 = vadd.f32 %v1404, %v1417
  %v1419 = vpop.f32.mrf.mxu0
  %v1420 = vadd.f32 %v1406, %v1419
  %1421 = vdwg.mxu0
  %1422 = vmatpush.bf16.msra.mxu0 %v954
  %1423 = vmatpush.bf16.msra.mxu0 %v950
  %1424 = vmatpush.bf16.msra.mxu0 %v946
  %1425 = vmatpush.bf16.msra.mxu0 %v942
  %1426 = vmatpush.bf16.msra.mxu0 %v938
  %1427 = vmatpush.bf16.msra.mxu0 %v934
  %1428 = vmatpush.bf16.msra.mxu0 %v930
  %1429 = vmatpush.bf16.msra.mxu0 %v926
  %1430 = vmatmul.bf16.gmra.mxu0 %v243
  %v1431 = vpop.f32.mrf.mxu0
  %v1432 = vadd.f32 %v1418, %v1431
  %v1433 = vpop.f32.mrf.mxu0
  %v1434 = vadd.f32 %v1420, %v1433
  %1435 = vdwg.mxu0
  %1436 = vmatpush.bf16.msra.mxu0 %v986
  %1437 = vmatpush.bf16.msra.mxu0 %v982
  %1438 = vmatpush.bf16.msra.mxu0 %v978
  %1439 = vmatpush.bf16.msra.mxu0 %v974
  %1440 = vmatpush.bf16.msra.mxu0 %v970
  %1441 = vmatpush.bf16.msra.mxu0 %v966
  %1442 = vmatpush.bf16.msra.mxu0 %v962
  %1443 = vmatpush.bf16.msra.mxu0 %v958
  %1444 = vmatmul.bf16.gmra.mxu0 %v244
  %v1445 = vpop.f32.mrf.mxu0
  %v1446 = vadd.f32 %v1432, %v1445
  %v1447 = vpop.f32.mrf.mxu0
  %v1448 = vadd.f32 %v1434, %v1447
  %1449 = vdwg.mxu0
  %1450 = vmatpush.bf16.msra.mxu0 %v1018
  %1451 = vmatpush.bf16.msra.mxu0 %v1014
  %1452 = vmatpush.bf16.msra.mxu0 %v1010
  %1453 = vmatpush.bf16.msra.mxu0 %v1006
  %1454 = vmatpush.bf16.msra.mxu0 %v1002
  %1455 = vmatpush.bf16.msra.mxu0 %v998
  %1456 = vmatpush.bf16.msra.mxu0 %v994
  %1457 = vmatpush.bf16.msra.mxu0 %v990
  %1458 = vmatmul.bf16.gmra.mxu0 %v245
  %v1459 = vpop.f32.mrf.mxu0
  %v1460 = vadd.f32 %v1446, %v1459
  %v1461 = vpop.f32.mrf.mxu0
  %v1462 = vadd.f32 %v1448, %v1461
  %1463 = vdwg.mxu0
  %1464 = vmatpush.bf16.msra.mxu0 %v859
  %1465 = vmatpush.bf16.msra.mxu0 %v855
  %1466 = vmatpush.bf16.msra.mxu0 %v851
  %1467 = vmatpush.bf16.msra.mxu0 %v847
  %1468 = vmatpush.bf16.msra.mxu0 %v843
  %1469 = vmatpush.bf16.msra.mxu0 %v839
  %1470 = vmatpush.bf16.msra.mxu0 %v835
  %1471 = vmatpush.bf16.msra.mxu0 %v831
  %1472 = vmatmul.bf16.gmra.mxu0 %v240
  %v1473 = vpop.f32.mrf.mxu0
  %v1474 = vadd.f32 %v217, %v1473
  %v1475 = vpop.f32.mrf.mxu0
  %v1476 = vadd.f32 %v217, %v1475
  %1477 = vdwg.mxu0
  %1478 = vmatpush.bf16.msra.mxu0 %v891
  %1479 = vmatpush.bf16.msra.mxu0 %v887
  %1480 = vmatpush.bf16.msra.mxu0 %v883
  %1481 = vmatpush.bf16.msra.mxu0 %v879
  %1482 = vmatpush.bf16.msra.mxu0 %v875
  %1483 = vmatpush.bf16.msra.mxu0 %v871
  %1484 = vmatpush.bf16.msra.mxu0 %v867
  %1485 = vmatpush.bf16.msra.mxu0 %v863
  %1486 = vmatmul.bf16.gmra.mxu0 %v241
  %v1487 = vpop.f32.mrf.mxu0
  %v1488 = vadd.f32 %v1474, %v1487
  %v1489 = vpop.f32.mrf.mxu0
  %v1490 = vadd.f32 %v1476, %v1489
  %1491 = vdwg.mxu0
  %1492 = vmatpush.bf16.msra.mxu0 %v923
  %1493 = vmatpush.bf16.msra.mxu0 %v919
  %1494 = vmatpush.bf16.msra.mxu0 %v915
  %1495 = vmatpush.bf16.msra.mxu0 %v911
  %1496 = vmatpush.bf16.msra.mxu0 %v907
  %1497 = vmatpush.bf16.msra.mxu0 %v903
  %1498 = vmatpush.bf16.msra.mxu0 %v899
  %1499 = vmatpush.bf16.msra.mxu0 %v895
  %1500 = vmatmul.bf16.gmra.mxu0 %v242
  %v1501 = vpop.f32.mrf.mxu0
  %v1502 = vadd.f32 %v1488, %v1501
  %v1503 = vpop.f32.mrf.mxu0
  %v1504 = vadd.f32 %v1490, %v1503
  %1505 = vdwg.mxu0
  %1506 = vmatpush.bf16.msra.mxu0 %v955
  %1507 = vmatpush.bf16.msra.mxu0 %v951
  %1508 = vmatpush.bf16.msra.mxu0 %v947
  %1509 = vmatpush.bf16.msra.mxu0 %v943
  %1510 = vmatpush.bf16.msra.mxu0 %v939
  %1511 = vmatpush.bf16.msra.mxu0 %v935
  %1512 = vmatpush.bf16.msra.mxu0 %v931
  %1513 = vmatpush.bf16.msra.mxu0 %v927
  %1514 = vmatmul.bf16.gmra.mxu0 %v243
  %v1515 = vpop.f32.mrf.mxu0
  %v1516 = vadd.f32 %v1502, %v1515
  %v1517 = vpop.f32.mrf.mxu0
  %v1518 = vadd.f32 %v1504, %v1517
  %1519 = vdwg.mxu0
  %1520 = vmatpush.bf16.msra.mxu0 %v987
  %1521 = vmatpush.bf16.msra.mxu0 %v983
  %1522 = vmatpush.bf16.msra.mxu0 %v979
  %1523 = vmatpush.bf16.msra.mxu0 %v975
  %1524 = vmatpush.bf16.msra.mxu0 %v971
  %1525 = vmatpush.bf16.msra.mxu0 %v967
  %1526 = vmatpush.bf16.msra.mxu0 %v963
  %1527 = vmatpush.bf16.msra.mxu0 %v959
  %1528 = vmatmul.bf16.gmra.mxu0 %v244
  %v1529 = vpop.f32.mrf.mxu0
  %v1530 = vadd.f32 %v1516, %v1529
  %v1531 = vpop.f32.mrf.mxu0
  %v1532 = vadd.f32 %v1518, %v1531
  %1533 = vdwg.mxu0
  %1534 = vmatpush.bf16.msra.mxu0 %v1019
  %1535 = vmatpush.bf16.msra.mxu0 %v1015
  %1536 = vmatpush.bf16.msra.mxu0 %v1011
  %1537 = vmatpush.bf16.msra.mxu0 %v1007
  %1538 = vmatpush.bf16.msra.mxu0 %v1003
  %1539 = vmatpush.bf16.msra.mxu0 %v999
  %1540 = vmatpush.bf16.msra.mxu0 %v995
  %1541 = vmatpush.bf16.msra.mxu0 %v991
  %1542 = vmatmul.bf16.gmra.mxu0 %v245
  %v1543 = vpop.f32.mrf.mxu0
  %v1544 = vadd.f32 %v1530, %v1543
  %v1545 = vpop.f32.mrf.mxu0
  %v1546 = vadd.f32 %v1532, %v1545
  %1547 = vdwg.mxu0
  %v1548 = vmul.f32 %v1292, %v1292
  %v1549 = vmul.f32 %v1376, %v1376
  %v1550 = vmul.f32 %v1460, %v1460
  %v1551 = vmul.f32 %v1544, %v1544
  %v1552 = vmul.f32 %v1294, %v1294
  %v1553 = vmul.f32 %v1378, %v1378
  %v1554 = vmul.f32 %v1462, %v1462
  %v1555 = vmul.f32 %v1546, %v1546
  %v1556 = vadd.f32 %v1548, %v1549
  %v1557 = vadd.f32 %v1556, %v1550
  %v1558 = vadd.f32 %v1557, %v1551
  %1559 = vadd.xlane.f32.xlu0 %v1558
  %v1560 = vpop.xlane.xlu0 %1559
  %v1561 = vadd.f32 %v1552, %v1553
  %v1562 = vadd.f32 %v1561, %v1554
  %v1563 = vadd.f32 %v1562, %v1555
  %1564 = vadd.xlane.f32.xlu0 %v1563
  %v1565 = vpop.xlane.xlu0 %1564
  %v1566 = vmax.f32 %v1560, 1e-24
  %v1567 = vmax.f32 %v1565, 1e-24
  %v1568 = vrsqrt.pop %v1566
  %v1569 = vmul.f32 %v1568, %v1566
  %v1570 = vmul.f32 %v1569, %v1568
  %v1571 = vmul.f32 0.5, %v1570
  %v1572 = vsub.f32 1.5, %v1571
  %v1573 = vmul.f32 %v1568, %v1572
  %vm1574 = vweird.f32 %v1566
  %vm1575 = vweird.f32 %v1568
  %vm1576 = vmor %vm1574, %vm1575
  %v1577 = vsel %vm1576, %v1568, %v1573
  %v1578 = vrsqrt.pop %v1567
  %v1579 = vmul.f32 %v1578, %v1567
  %v1580 = vmul.f32 %v1579, %v1578
  %v1581 = vmul.f32 0.5, %v1580
  %v1582 = vsub.f32 1.5, %v1581
  %v1583 = vmul.f32 %v1578, %v1582
  %vm1584 = vweird.f32 %v1567
  %vm1585 = vweird.f32 %v1578
  %vm1586 = vmor %vm1584, %vm1585
  %v1587 = vsel %vm1586, %v1578, %v1583
  %v1588 = vmul.f32 %v1292, %v1577
  %v1589 = vmul.f32 %v1376, %v1577
  %v1590 = vmul.f32 %v1460, %v1577
  %v1591 = vmul.f32 %v1544, %v1577
  %v1592 = vmul.f32 %v1294, %v1587
  %v1593 = vmul.f32 %v1378, %v1587
  %v1594 = vmul.f32 %v1462, %v1587
  %v1595 = vmul.f32 %v1546, %v1587
  %1596 = vst [vmem:[%s3] sm:$0xff] %v1588
  %1597 = vst [vmem:[%s3 + $0x8] sm:$0xff] %v1589
  %1598 = vst [vmem:[%s3 + $0x10] sm:$0xff] %v1590
  %1599 = vst [vmem:[%s3 + $0x18] sm:$0xff] %v1591
  %1600 = vst [vmem:[%s3 + $0x20] sm:$0xff] %v1592
  %1601 = vst [vmem:[%s3 + $0x28] sm:$0xff] %v1593
  %1602 = vst [vmem:[%s3 + $0x30] sm:$0xff] %v1594
  %1603 = vst [vmem:[%s3 + $0x38] sm:$0xff] %v1595
  // Predicated region
  $region14: #{id_extractor_forward.1} parent=0 // pred_check
    _
  $region15: #{id_extractor_forward.1} parent=0 // pred_check_branch
    %1605 = sbr.rel (0) target = $region17
  $region16: #{id_extractor_forward.1} parent=0 // pred_region
    _
  $region17: #{id_extractor_forward.1} parent=0 // pred_fallthru
    _
  // Predicated region
  $region18: #{id_extractor_forward.1} parent=0 // pred_check
    _
  $region19: #{id_extractor_forward.1} parent=0 // pred_check_branch
    %1607 = sbr.rel (0) target = $region21
  $region20: #{id_extractor_forward.1} parent=0 // pred_region
    _
  $region21: #{id_extractor_forward.1} parent=0 // pred_fallthru
    _

</llo_original>
